<compile_context>
chip_gen: v7x
topology: tpu7x:2x2x1
jax: 0.10.0
libtpu: 0.0.40
codegen_flags: <defaults>
</compile_context>

<pallas_src>
import functools

import jax
import jax.numpy as jnp
from jax.experimental import pallas as pl
from jax.experimental.pallas import tpu as pltpu

NH = 4          # number of hidden layers (module-level `nh = 4`)
ACT = "Sigmoid"  # module-level `act`
LANE = 128


def hmu(i, n, ty):
    # TODO(synk): `hmu` is not defined in the reference source; use constant hidden width n.
    return n


def _round_up(v, m):
    return ((v + m - 1) // m) * m


def _mlp_kernel(x_ref, w_ref, b_ref, out_ref, *, kp, hp, np_out, nh):
    """Fused MLP forward on one batch tile.

    x_ref  : (tile_b, kp)      f32
    w_ref  : (kp + nh*hp, max(hp, np_out))  bf16  -- packed, zero-padded weights
    b_ref  : (nh, hp)          f32  -- packed, zero-padded biases
    out_ref: (tile_b, np_out)  f32
    """
    # Layer 0: Linear + bias  (bf16 MXU inputs, f32 accumulation).
    xb = x_ref[...].astype(jnp.bfloat16)
    h = jnp.dot(xb, w_ref[0:kp, 0:hp], preferred_element_type=jnp.float32)
    h = h + b_ref[0:1, :]

    # Layers 1 .. nh-1: sigmoid -> Linear(with bias).  All slice offsets are
    # static multiples of 128, so the ref slices are aligned and free.
    row = kp
    for l in range(1, nh):
        h = jax.nn.sigmoid(h)                                   # f32 (EUP)
        h = jnp.dot(h.astype(jnp.bfloat16), w_ref[row:row + hp, 0:hp],
                    preferred_element_type=jnp.float32)
        h = h + b_ref[l:l + 1, :]
        row += hp

    # Last layer: sigmoid -> Linear(no bias).  Output stays f32 (no cast).
    h = jax.nn.sigmoid(h)
    out_ref[...] = jnp.dot(h.astype(jnp.bfloat16), w_ref[row:row + hp, 0:np_out],
                           preferred_element_type=jnp.float32)


@jax.jit
def neural_network_forward(x, weights, biases):
    """weights[l]: (in_l, out_l) f32 ; biases[l]: (1, out_l) f32 for l in 0..NH-1."""
    batch, sizeinput = x.shape
    hidden = weights[0].shape[1]
    sizeoutput = weights[-1].shape[1]

    # Lane-dense (multiple-of-128) padded widths.  Zero padding keeps the math
    # exact: padded hidden units get h=0 -> sigmoid=0.5, but the corresponding
    # next-layer weight rows are zero, so their contribution is exactly 0.
    kp = _round_up(sizeinput, LANE)
    hp = _round_up(hidden, LANE)
    np_out = _round_up(sizeoutput, LANE)
    wcols = max(hp, np_out)
    wrows = kp + NH * hp

    # Pack all weights into one bf16 slab (one DMA instead of five).
    w_slab = jnp.zeros((wrows, wcols), jnp.bfloat16)
    w_slab = w_slab.at[0:sizeinput, 0:hidden].set(weights[0].astype(jnp.bfloat16))
    row = kp
    for l in range(1, NH):
        w_slab = w_slab.at[row:row + hidden, 0:hidden].set(weights[l].astype(jnp.bfloat16))
        row += hp
    w_slab = w_slab.at[row:row + hidden, 0:sizeoutput].set(weights[NH].astype(jnp.bfloat16))

    # Pack all biases into one f32 slab (one DMA instead of four).
    b_slab = jnp.zeros((NH, hp), jnp.float32)
    for l in range(NH):
        b_slab = b_slab.at[l, 0:hidden].set(biases[l].reshape(-1))

    # Batch tiling: tile of up to 512 rows, batch zero-padded to a tile multiple.
    tile_b = min(512, _round_up(batch, 8))
    bp = _round_up(batch, tile_b)
    x_p = jnp.zeros((bp, kp), jnp.float32).at[0:batch, 0:sizeinput].set(x)
    grid = (bp // tile_b,)

    # Explicit VMEM budget: double-buffered x/out tiles + weight/bias slabs +
    # a few live f32 activation tiles, with 2x headroom (matters on v7x: 64 MiB).
    vmem_bytes = (2 * tile_b * kp * 4 + 2 * w_slab.size * 2 + 2 * b_slab.size * 4
                  + 2 * tile_b * np_out * 4 + 4 * tile_b * hp * 4)
    vmem_limit = int(min(max(2 * vmem_bytes, 8 << 20), 100 << 20))

    out_p = pl.pallas_call(
        functools.partial(_mlp_kernel, kp=kp, hp=hp, np_out=np_out, nh=NH),
        out_shape=jax.ShapeDtypeStruct((bp, np_out), jnp.float32),
        grid=grid,
        in_specs=[
            pl.BlockSpec((tile_b, kp), lambda i: (i, 0)),      # x: tiled over batch
            pl.BlockSpec((wrows, wcols), lambda i: (0, 0)),    # weights: grid-invariant
            pl.BlockSpec((NH, hp), lambda i: (0, 0)),          # biases:  grid-invariant
        ],
        out_specs=pl.BlockSpec((tile_b, np_out), lambda i: (i, 0)),
        compiler_params=pltpu.CompilerParams(
            dimension_semantics=("parallel",),                 # v7x: 2 TCs share batch tiles
            vmem_limit_bytes=vmem_limit),
    )(x_p, w_slab, b_slab)

    return out_p[0:batch, 0:sizeoutput]


def init_params(key, sizeinput, sizeoutput, n, ty=None):
    """Deterministic parameter init mirroring the module's layer shapes.

    Layer widths: sizeinput -> hmu(1) -> ... -> hmu(NH) -> sizeoutput.
    Last linear has bias=False (as in the reference).
    """
    dims = [sizeinput] + [hmu(i, n, ty) for i in range(1, NH + 1)] + [sizeoutput]
    weights, biases = [], []
    for l in range(NH + 1):
        key, kw, kb = jax.random.split(key, 3)
        fan_in = dims[l]
        bound = 1.0 / (fan_in ** 0.5)  # PyTorch default Linear init range
        w = jax.random.uniform(kw, (dims[l], dims[l + 1]), jnp.float32,
                               minval=-bound, maxval=bound)
        weights.append(w)
        if l < NH:  # last layer has bias=False
            b = jax.random.uniform(kb, (1, dims[l + 1]), jnp.float32,
                                   minval=-bound, maxval=bound)
            biases.append(b)
    return weights, biases


def _reference_forward_f32(x, weights, biases):
    h = x @ weights[0] + biases[0]
    for l in range(1, NH):
        h = jax.nn.sigmoid(h)
        h = h @ weights[l] + biases[l]
    h = jax.nn.sigmoid(h)
    return h @ weights[NH]


def _reference_forward_bf16(x, weights, biases):
    def bdot(a, w):
        return jnp.dot(a.astype(jnp.bfloat16), w.astype(jnp.bfloat16),
                       preferred_element_type=jnp.float32)
    h = bdot(x, weights[0]) + biases[0]
    for l in range(1, NH):
        h = jax.nn.sigmoid(h)
        h = bdot(h, weights[l]) + biases[l]
    h = jax.nn.sigmoid(h)
    return bdot(h, weights[NH])


if __name__ == "__main__":
    key = jax.random.PRNGKey(0)
    key, kx = jax.random.split(key)

    batch = 8
    sizeinput = 32
    sizeoutput = 16
    n = 32  # hidden width via hmu

    x = jax.random.normal(kx, (batch, sizeinput), jnp.float32)
    weights, biases = init_params(key, sizeinput, sizeoutput, n)

    out = neural_network_forward(x, weights, biases)
    out = jax.block_until_ready(out)

    ref_bf16 = _reference_forward_bf16(x, weights, biases)
    ref_f32 = _reference_forward_f32(x, weights, biases)

    assert out.shape == (batch, sizeoutput)
    # Kernel uses bf16 MXU inputs with f32 accumulation -> compare against a
    # matching bf16 reference (tight) and the f32 reference (loose).
    assert jnp.allclose(out, ref_bf16, atol=1e-2, rtol=1e-2)
    assert jnp.allclose(out, ref_f32, atol=5e-2, rtol=5e-2)

    print("KERNEL_OK")
</pallas_src>

<mosaic_0001>
module attributes {stable_mosaic.version = 11 : i64} {
  func.func @_mlp_kernel(%arg0: i32, %arg1: memref<8x128xf32, #tpu.memory_space<vmem>>, %arg2: memref<640x128xbf16, #tpu.memory_space<vmem>>, %arg3: memref<4x128xf32, #tpu.memory_space<vmem>>, %arg4: memref<8x128xf32, #tpu.memory_space<vmem>>) attributes {dimension_semantics = [#tpu.dimension_semantics<parallel>], iteration_bounds = array<i64: 1>, scalar_prefetch = 0 : i64, scratch_operands = 0 : i64, tpu.core_type = #tpu.core_type<tc>, window_params = [{transform_indices = @transform_0, window_bounds = array<i64: 8, 128>}, {pipeline_mode = #tpu.pipeline_mode<synchronous>, transform_indices = @transform_1, window_bounds = array<i64: 640, 128>}, {pipeline_mode = #tpu.pipeline_mode<synchronous>, transform_indices = @transform_2, window_bounds = array<i64: 4, 128>}, {transform_indices = @transform_3, window_bounds = array<i64: 8, 128>}]} {
    %c0 = arith.constant 0 : index
    %c0_0 = arith.constant 0 : index
    %0 = vector.load %arg1[%c0, %c0_0] : memref<8x128xf32, #tpu.memory_space<vmem>>, vector<8x128xf32>
    %1 = arith.truncf %0 : vector<8x128xf32> to vector<8x128xbf16>
    %c0_1 = arith.constant 0 : index
    %c0_2 = arith.constant 0 : index
    %2 = vector.load %arg2[%c0_1, %c0_2] : memref<640x128xbf16, #tpu.memory_space<vmem>>, vector<128x128xbf16>
    %cst = arith.constant dense<0.000000e+00> : vector<8x128xf32>
    %3 = tpu.matmul %1, %2, %cst {dimension_numbers = #tpu.dot_dimension_numbers<[1], [0], [0], [1], [0, 0, 1, 1], [], []>} : vector<8x128xbf16>, vector<128x128xbf16>, vector<8x128xf32> -> vector<8x128xf32>
    %c0_3 = arith.constant 0 : index
    %c0_4 = arith.constant 0 : index
    %4 = vector.load %arg3[%c0_3, %c0_4] : memref<4x128xf32, #tpu.memory_space<vmem>>, vector<1x128xf32>
    %5 = vector.broadcast %4 : vector<1x128xf32> to vector<8x128xf32>
    %6 = arith.addf %3, %5 : vector<8x128xf32>
    %7 = arith.negf %6 : vector<8x128xf32>
    %8 = math.exp %7 : vector<8x128xf32>
    %cst_5 = arith.constant 1.000000e+00 : f32
    %9 = vector.broadcast %cst_5 : f32 to vector<8x128xf32>
    %10 = arith.addf %9, %8 : vector<8x128xf32>
    %11 = arith.divf %9, %10 : vector<8x128xf32>
    %12 = arith.truncf %11 : vector<8x128xf32> to vector<8x128xbf16>
    %c128 = arith.constant 128 : index
    %c0_6 = arith.constant 0 : index
    %13 = vector.load %arg2[%c128, %c0_6] : memref<640x128xbf16, #tpu.memory_space<vmem>>, vector<128x128xbf16>
    %cst_7 = arith.constant dense<0.000000e+00> : vector<8x128xf32>
    %14 = tpu.matmul %12, %13, %cst_7 {dimension_numbers = #tpu.dot_dimension_numbers<[1], [0], [0], [1], [0, 0, 1, 1], [], []>} : vector<8x128xbf16>, vector<128x128xbf16>, vector<8x128xf32> -> vector<8x128xf32>
    %c1 = arith.constant 1 : index
    %c0_8 = arith.constant 0 : index
    %15 = vector.load %arg3[%c1, %c0_8] : memref<4x128xf32, #tpu.memory_space<vmem>>, vector<1x128xf32>
    %16 = vector.broadcast %15 : vector<1x128xf32> to vector<8x128xf32>
    %17 = arith.addf %14, %16 : vector<8x128xf32>
    %18 = arith.negf %17 : vector<8x128xf32>
    %19 = math.exp %18 : vector<8x128xf32>
    %cst_9 = arith.constant 1.000000e+00 : f32
    %20 = vector.broadcast %cst_9 : f32 to vector<8x128xf32>
    %21 = arith.addf %20, %19 : vector<8x128xf32>
    %22 = arith.divf %20, %21 : vector<8x128xf32>
    %23 = arith.truncf %22 : vector<8x128xf32> to vector<8x128xbf16>
    %c256 = arith.constant 256 : index
    %c0_10 = arith.constant 0 : index
    %24 = vector.load %arg2[%c256, %c0_10] : memref<640x128xbf16, #tpu.memory_space<vmem>>, vector<128x128xbf16>
    %cst_11 = arith.constant dense<0.000000e+00> : vector<8x128xf32>
    %25 = tpu.matmul %23, %24, %cst_11 {dimension_numbers = #tpu.dot_dimension_numbers<[1], [0], [0], [1], [0, 0, 1, 1], [], []>} : vector<8x128xbf16>, vector<128x128xbf16>, vector<8x128xf32> -> vector<8x128xf32>
    %c2 = arith.constant 2 : index
    %c0_12 = arith.constant 0 : index
    %26 = vector.load %arg3[%c2, %c0_12] : memref<4x128xf32, #tpu.memory_space<vmem>>, vector<1x128xf32>
    %27 = vector.broadcast %26 : vector<1x128xf32> to vector<8x128xf32>
    %28 = arith.addf %25, %27 : vector<8x128xf32>
    %29 = arith.negf %28 : vector<8x128xf32>
    %30 = math.exp %29 : vector<8x128xf32>
    %cst_13 = arith.constant 1.000000e+00 : f32
    %31 = vector.broadcast %cst_13 : f32 to vector<8x128xf32>
    %32 = arith.addf %31, %30 : vector<8x128xf32>
    %33 = arith.divf %31, %32 : vector<8x128xf32>
    %34 = arith.truncf %33 : vector<8x128xf32> to vector<8x128xbf16>
    %c384 = arith.constant 384 : index
    %c0_14 = arith.constant 0 : index
    %35 = vector.load %arg2[%c384, %c0_14] : memref<640x128xbf16, #tpu.memory_space<vmem>>, vector<128x128xbf16>
    %cst_15 = arith.constant dense<0.000000e+00> : vector<8x128xf32>
    %36 = tpu.matmul %34, %35, %cst_15 {dimension_numbers = #tpu.dot_dimension_numbers<[1], [0], [0], [1], [0, 0, 1, 1], [], []>} : vector<8x128xbf16>, vector<128x128xbf16>, vector<8x128xf32> -> vector<8x128xf32>
    %c3 = arith.constant 3 : index
    %c0_16 = arith.constant 0 : index
    %37 = vector.load %arg3[%c3, %c0_16] : memref<4x128xf32, #tpu.memory_space<vmem>>, vector<1x128xf32>
    %38 = vector.broadcast %37 : vector<1x128xf32> to vector<8x128xf32>
    %39 = arith.addf %36, %38 : vector<8x128xf32>
    %40 = arith.negf %39 : vector<8x128xf32>
    %41 = math.exp %40 : vector<8x128xf32>
    %cst_17 = arith.constant 1.000000e+00 : f32
    %42 = vector.broadcast %cst_17 : f32 to vector<8x128xf32>
    %43 = arith.addf %42, %41 : vector<8x128xf32>
    %44 = arith.divf %42, %43 : vector<8x128xf32>
    %45 = arith.truncf %44 : vector<8x128xf32> to vector<8x128xbf16>
    %c512 = arith.constant 512 : index
    %c0_18 = arith.constant 0 : index
    %46 = vector.load %arg2[%c512, %c0_18] : memref<640x128xbf16, #tpu.memory_space<vmem>>, vector<128x128xbf16>
    %cst_19 = arith.constant dense<0.000000e+00> : vector<8x128xf32>
    %47 = tpu.matmul %45, %46, %cst_19 {dimension_numbers = #tpu.dot_dimension_numbers<[1], [0], [0], [1], [0, 0, 1, 1], [], []>} : vector<8x128xbf16>, vector<128x128xbf16>, vector<8x128xf32> -> vector<8x128xf32>
    %c0_20 = arith.constant 0 : index
    %c0_21 = arith.constant 0 : index
    %48 = vector.load %arg4[%c0_20, %c0_21] : memref<8x128xf32, #tpu.memory_space<vmem>>, vector<8x128xf32>
    tpu.vector_store %arg4[%c0_20, %c0_21], %47 {strides = array<i32>} : memref<8x128xf32, #tpu.memory_space<vmem>>, vector<8x128xf32>,
    return
  }
  func.func @transform_0(%arg0: i32) -> (i32, i32) {
    %c0_i32 = arith.constant 0 : i32
    %c0_i32_0 = arith.constant 0 : i32
    return %arg0, %c0_i32 : i32, i32
  }
  func.func @transform_1(%arg0: i32) -> (i32, i32) {
    %c0_i32 = arith.constant 0 : i32
    %c0_i32_0 = arith.constant 0 : i32
    %c0_i32_1 = arith.constant 0 : i32
    return %c0_i32, %c0_i32_0 : i32, i32
  }
  func.func @transform_2(%arg0: i32) -> (i32, i32) {
    %c0_i32 = arith.constant 0 : i32
    %c0_i32_0 = arith.constant 0 : i32
    %c0_i32_1 = arith.constant 0 : i32
    return %c0_i32, %c0_i32_0 : i32, i32
  }
  func.func @transform_3(%arg0: i32) -> (i32, i32) {
    %c0_i32 = arith.constant 0 : i32
    %c0_i32_0 = arith.constant 0 : i32
    return %arg0, %c0_i32 : i32, i32
  }
}

</mosaic_0001>

<llo_original>
// kernel: neural_network_forward.1
$region0: #{neural_network_forward.1}
  #allocation0 [shape = 'u32[]', space=smem, size = 0x4, offset = 0x4, fixed_abs, tag = 'smem constant byte address 0x4 - core index']
  #allocation1 [shape = 'u32[144,128]{1,0:T(1,128)}', space=vmem, size = 0x12000, scoped, tag = 'internal scratch']
  %s0 = inlined_call_operand.vmem [shape: f32[8,128], index: 0, kind: input, shape index: {}]
  %s1 = inlined_call_operand.vmem [shape: bf16[640,128], index: 1, kind: input, shape index: {}]
  %s2 = inlined_call_operand.vmem [shape: f32[4,128], index: 2, kind: input, shape index: {}]
  %s3 = inlined_call_operand.hbm [shape: f32[8,128], index: 3, kind: output, shape index: {}]
  %s4 = sld [smem:[#allocation0]]
  $region22: #{neural_network_forward.1} parent=0
    _
  %s6 = ssub.s32 1, %s4
  %s7 = scalar_select 0, %s6, %s4
  $region1: #{neural_network_forward.1} parent=0
    #allocation2 [shape = 'u8[4096]{0}', space=vmem, size = 0x1000, scoped, tag = 'output window, operand 0, single buffered']
    #allocation3 [shape = 's32[1]{0}', space=sflag, size = 0x4, scoped, tag = 'scoped memory for neural_network_forward.1']
    %8 = vsyncpa [#allocation3], 0
    // Predicated region
    $region2: #{neural_network_forward.1} parent=1 // pred_check
      _
    $region3: #{neural_network_forward.1} parent=1 // pred_check_branch
      %10 = sbr.rel (0) target = $region5
    $region4: #{neural_network_forward.1} parent=1 // pred_region
      _
    $region5: #{neural_network_forward.1} parent=1 // pred_fallthru
      _
    // Predicated region
    $region6: #{neural_network_forward.1} parent=1 // pred_check
      _
    $region7: #{neural_network_forward.1} parent=1 // pred_check_branch
      %12 = sbr.rel (0) target = $region9
    $region8: #{neural_network_forward.1} parent=1 // pred_region
      _
    $region9: #{neural_network_forward.1} parent=1 // pred_fallthru
      _
    // Predicated region
    $region10: #{neural_network_forward.1} parent=1 // pred_check
      _
    $region11: #{neural_network_forward.1} parent=1 // pred_check_branch
      %14 = sbr.rel (0) target = $region13
    $region12: #{neural_network_forward.1} parent=1 // pred_region
      _
    $region13: #{neural_network_forward.1} parent=1 // pred_fallthru
      _
    %v16 = vld [vmem:[%s0] sm:$0xff]
    %v17 = vpack.c.bf16 %v16, %v16
    %v18 = vld [vmem:[%s1] sm:$0xf]
    %v19 = vld [vmem:[%s1 + $0x4] sm:$0xf]
    %v20 = vld [vmem:[%s1 + $0x8] sm:$0xf]
    %v21 = vld [vmem:[%s1 + $0xc] sm:$0xf]
    %v22 = vld [vmem:[%s1 + $0x10] sm:$0xf]
    %v23 = vld [vmem:[%s1 + $0x14] sm:$0xf]
    %v24 = vld [vmem:[%s1 + $0x18] sm:$0xf]
    %v25 = vld [vmem:[%s1 + $0x1c] sm:$0xf]
    %v26 = vld [vmem:[%s1 + $0x20] sm:$0xf]
    %v27 = vld [vmem:[%s1 + $0x24] sm:$0xf]
    %v28 = vld [vmem:[%s1 + $0x28] sm:$0xf]
    %v29 = vld [vmem:[%s1 + $0x2c] sm:$0xf]
    %v30 = vld [vmem:[%s1 + $0x30] sm:$0xf]
    %v31 = vld [vmem:[%s1 + $0x34] sm:$0xf]
    %v32 = vld [vmem:[%s1 + $0x38] sm:$0xf]
    %v33 = vld [vmem:[%s1 + $0x3c] sm:$0xf]
    %v34 = vld [vmem:[%s2] sm:$0x1]
    %v35 = vlaneseq
    %v36 = vshrl.u32 %v35, 7
    %v37 = vsub.s32 0, %v36
    %v38 = vrot.slane %v34, %v37
    %v55 = vunpack.c.l.b16 %v18
    %v56 = vunpack.c.l.b16 %v19
    %v57 = vunpack.c.l.b16 %v20
    %v58 = vunpack.c.l.b16 %v21
    %v59 = vunpack.c.l.b16 %v22
    %v60 = vunpack.c.l.b16 %v23
    %v61 = vunpack.c.l.b16 %v24
    %v62 = vunpack.c.l.b16 %v25
    %v63 = vunpack.c.l.b16 %v26
    %v64 = vunpack.c.l.b16 %v27
    %v65 = vunpack.c.l.b16 %v28
    %v66 = vunpack.c.l.b16 %v29
    %v67 = vunpack.c.l.b16 %v30
    %v68 = vunpack.c.l.b16 %v31
    %v69 = vunpack.c.l.b16 %v32
    %v70 = vunpack.c.l.b16 %v33
    %v71 = vpack.c.b16 %v56, %v55
    %v72 = vpack.c.b16 %v58, %v57
    %v73 = vpack.c.b16 %v60, %v59
    %v74 = vpack.c.b16 %v62, %v61
    %v75 = vpack.c.b16 %v64, %v63
    %v76 = vpack.c.b16 %v66, %v65
    %v77 = vpack.c.b16 %v68, %v67
    %v78 = vpack.c.b16 %v70, %v69
    %87 = vmatprep.subr.bf16.mxu0 0
    %88 = vmatpush1.bf16.msra.mxu0 %v71
    %89 = vmatprep.subr.bf16.mxu0 0
    %90 = vmatpush1.bf16.msra.mxu0 %v72
    %91 = vmatprep.subr.bf16.mxu0 0
    %92 = vmatpush1.bf16.msra.mxu0 %v73
    %93 = vmatprep.subr.bf16.mxu0 0
    %94 = vmatpush1.bf16.msra.mxu0 %v74
    %95 = vmatprep.subr.bf16.mxu0 0
    %96 = vmatpush1.bf16.msra.mxu0 %v75
    %97 = vmatprep.subr.bf16.mxu0 0
    %98 = vmatpush1.bf16.msra.mxu0 %v76
    %99 = vmatprep.subr.bf16.mxu0 0
    %100 = vmatpush1.bf16.msra.mxu0 %v77
    %101 = vmatprep.subr.bf16.mxu0 0
    %102 = vmatpush1.bf16.msra.mxu0 %v78
    %103 = vmatprep.subr.bf16.mxu0 0
    %104 = vmatpush1.bf16.msra.mxu0 0
    %105 = vmatprep.subr.bf16.mxu0 0
    %106 = vmatpush1.bf16.msra.mxu0 0
    %107 = vmatprep.subr.bf16.mxu0 0
    %108 = vmatpush1.bf16.msra.mxu0 0
    %109 = vmatprep.subr.bf16.mxu0 0
    %110 = vmatpush1.bf16.msra.mxu0 0
    %111 = vmatprep.subr.bf16.mxu0 0
    %112 = vmatpush1.bf16.msra.mxu0 0
    %113 = vmatprep.subr.bf16.mxu0 0
    %114 = vmatpush1.bf16.msra.mxu0 0
    %115 = vmatprep.subr.bf16.mxu0 0
    %116 = vmatpush1.bf16.msra.mxu0 0
    %117 = vmatprep.subr.bf16.mxu0 0
    %118 = vmatpush1.bf16.msra.mxu0 0
    %119 = vmatprep.mubr.bf16.mxu0 0
    %120 = vmatmul.mubr.bf16.gmra.mrb[0].mxu0 %v17
    %v121 = vpop.f32.mrb[0].mxu0
    %v122 = vadd.f32 %v38, %v121
    %v123 = vpop.f32.mrb[0].mxu0
    %v124 = vpop.f32.mrb[0].mxu0
    %v125 = vpop.f32.mrb[0].mxu0
    %126 = vdwg.mxu0
    %v127 = vxor.u32 %v122, 2147483648
    %v128 = vmul.f32 %v127, 1.442695
    %v129 = vpow.pop %v128
    %v130 = vadd.f32 %v129, 1.0
    %v131 = vrcp.pop %v130
    %v132 = vmul.f32 1.0, %v131
    %v133 = vpack.c.bf16 %v132, %v132
    %v134 = vld [vmem:[%s1 + $0x40] sm:$0xf]
    %v135 = vld [vmem:[%s1 + $0x44] sm:$0xf]
    %v136 = vld [vmem:[%s1 + $0x48] sm:$0xf]
    %v137 = vld [vmem:[%s1 + $0x4c] sm:$0xf]
    %v138 = vld [vmem:[%s1 + $0x50] sm:$0xf]
    %v139 = vld [vmem:[%s1 + $0x54] sm:$0xf]
    %v140 = vld [vmem:[%s1 + $0x58] sm:$0xf]
    %v141 = vld [vmem:[%s1 + $0x5c] sm:$0xf]
    %v142 = vld [vmem:[%s1 + $0x60] sm:$0xf]
    %v143 = vld [vmem:[%s1 + $0x64] sm:$0xf]
    %v144 = vld [vmem:[%s1 + $0x68] sm:$0xf]
    %v145 = vld [vmem:[%s1 + $0x6c] sm:$0xf]
    %v146 = vld [vmem:[%s1 + $0x70] sm:$0xf]
    %v147 = vld [vmem:[%s1 + $0x74] sm:$0xf]
    %v148 = vld [vmem:[%s1 + $0x78] sm:$0xf]
    %v149 = vld [vmem:[%s1 + $0x7c] sm:$0xf]
    %v150 = vld [vmem:[%s2 + $0x1] sm:$0x1]
    %v151 = vlaneseq
    %v152 = vshrl.u32 %v151, 7
    %v153 = vsub.s32 0, %v152
    %v154 = vrot.slane %v150, %v153
    %v171 = vunpack.c.l.b16 %v134
    %v172 = vunpack.c.l.b16 %v135
    %v173 = vunpack.c.l.b16 %v136
    %v174 = vunpack.c.l.b16 %v137
    %v175 = vunpack.c.l.b16 %v138
    %v176 = vunpack.c.l.b16 %v139
    %v177 = vunpack.c.l.b16 %v140
    %v178 = vunpack.c.l.b16 %v141
    %v179 = vunpack.c.l.b16 %v142
    %v180 = vunpack.c.l.b16 %v143
    %v181 = vunpack.c.l.b16 %v144
    %v182 = vunpack.c.l.b16 %v145
    %v183 = vunpack.c.l.b16 %v146
    %v184 = vunpack.c.l.b16 %v147
    %v185 = vunpack.c.l.b16 %v148
    %v186 = vunpack.c.l.b16 %v149
    %v187 = vpack.c.b16 %v172, %v171
    %v188 = vpack.c.b16 %v174, %v173
    %v189 = vpack.c.b16 %v176, %v175
    %v190 = vpack.c.b16 %v178, %v177
    %v191 = vpack.c.b16 %v180, %v179
    %v192 = vpack.c.b16 %v182, %v181
    %v193 = vpack.c.b16 %v184, %v183
    %v194 = vpack.c.b16 %v186, %v185
    %203 = vmatprep.subr.bf16.mxu0 0
    %204 = vmatpush1.bf16.msra.mxu0 %v187
    %205 = vmatprep.subr.bf16.mxu0 0
    %206 = vmatpush1.bf16.msra.mxu0 %v188
    %207 = vmatprep.subr.bf16.mxu0 0
    %208 = vmatpush1.bf16.msra.mxu0 %v189
    %209 = vmatprep.subr.bf16.mxu0 0
    %210 = vmatpush1.bf16.msra.mxu0 %v190
    %211 = vmatprep.subr.bf16.mxu0 0
    %212 = vmatpush1.bf16.msra.mxu0 %v191
    %213 = vmatprep.subr.bf16.mxu0 0
    %214 = vmatpush1.bf16.msra.mxu0 %v192
    %215 = vmatprep.subr.bf16.mxu0 0
    %216 = vmatpush1.bf16.msra.mxu0 %v193
    %217 = vmatprep.subr.bf16.mxu0 0
    %218 = vmatpush1.bf16.msra.mxu0 %v194
    %219 = vmatprep.subr.bf16.mxu0 0
    %220 = vmatpush1.bf16.msra.mxu0 0
    %221 = vmatprep.subr.bf16.mxu0 0
    %222 = vmatpush1.bf16.msra.mxu0 0
    %223 = vmatprep.subr.bf16.mxu0 0
    %224 = vmatpush1.bf16.msra.mxu0 0
    %225 = vmatprep.subr.bf16.mxu0 0
    %226 = vmatpush1.bf16.msra.mxu0 0
    %227 = vmatprep.subr.bf16.mxu0 0
    %228 = vmatpush1.bf16.msra.mxu0 0
    %229 = vmatprep.subr.bf16.mxu0 0
    %230 = vmatpush1.bf16.msra.mxu0 0
    %231 = vmatprep.subr.bf16.mxu0 0
    %232 = vmatpush1.bf16.msra.mxu0 0
    %233 = vmatprep.subr.bf16.mxu0 0
    %234 = vmatpush1.bf16.msra.mxu0 0
    %235 = vmatprep.mubr.bf16.mxu0 0
    %236 = vmatmul.mubr.bf16.gmra.mrb[0].mxu0 %v133
    %v237 = vpop.f32.mrb[0].mxu0
    %v238 = vadd.f32 %v154, %v237
    %v239 = vpop.f32.mrb[0].mxu0
    %v240 = vpop.f32.mrb[0].mxu0
    %v241 = vpop.f32.mrb[0].mxu0
    %242 = vdwg.mxu0
    %v243 = vxor.u32 %v238, 2147483648
    %v244 = vmul.f32 %v243, 1.442695
    %v245 = vpow.pop %v244
    %v246 = vadd.f32 %v245, 1.0
    %v247 = vrcp.pop %v246
    %v248 = vmul.f32 1.0, %v247
    %v249 = vpack.c.bf16 %v248, %v248
    %v250 = vld [vmem:[%s1 + $0x80] sm:$0xf]
    %v251 = vld [vmem:[%s1 + $0x84] sm:$0xf]
    %v252 = vld [vmem:[%s1 + $0x88] sm:$0xf]
    %v253 = vld [vmem:[%s1 + $0x8c] sm:$0xf]
    %v254 = vld [vmem:[%s1 + $0x90] sm:$0xf]
    %v255 = vld [vmem:[%s1 + $0x94] sm:$0xf]
    %v256 = vld [vmem:[%s1 + $0x98] sm:$0xf]
    %v257 = vld [vmem:[%s1 + $0x9c] sm:$0xf]
    %v258 = vld [vmem:[%s1 + $0xa0] sm:$0xf]
    %v259 = vld [vmem:[%s1 + $0xa4] sm:$0xf]
    %v260 = vld [vmem:[%s1 + $0xa8] sm:$0xf]
    %v261 = vld [vmem:[%s1 + $0xac] sm:$0xf]
    %v262 = vld [vmem:[%s1 + $0xb0] sm:$0xf]
    %v263 = vld [vmem:[%s1 + $0xb4] sm:$0xf]
    %v264 = vld [vmem:[%s1 + $0xb8] sm:$0xf]
    %v265 = vld [vmem:[%s1 + $0xbc] sm:$0xf]
    %v266 = vld [vmem:[%s2 + $0x2] sm:$0x1]
    %v267 = vlaneseq
    %v268 = vshrl.u32 %v267, 7
    %v269 = vsub.s32 0, %v268
    %v270 = vrot.slane %v266, %v269
    %v287 = vunpack.c.l.b16 %v250
    %v288 = vunpack.c.l.b16 %v251
    %v289 = vunpack.c.l.b16 %v252
    %v290 = vunpack.c.l.b16 %v253
    %v291 = vunpack.c.l.b16 %v254
    %v292 = vunpack.c.l.b16 %v255
    %v293 = vunpack.c.l.b16 %v256
    %v294 = vunpack.c.l.b16 %v257
    %v295 = vunpack.c.l.b16 %v258
    %v296 = vunpack.c.l.b16 %v259
    %v297 = vunpack.c.l.b16 %v260
    %v298 = vunpack.c.l.b16 %v261
    %v299 = vunpack.c.l.b16 %v262
    %v300 = vunpack.c.l.b16 %v263
    %v301 = vunpack.c.l.b16 %v264
    %v302 = vunpack.c.l.b16 %v265
    %v303 = vpack.c.b16 %v288, %v287
    %v304 = vpack.c.b16 %v290, %v289
    %v305 = vpack.c.b16 %v292, %v291
    %v306 = vpack.c.b16 %v294, %v293
    %v307 = vpack.c.b16 %v296, %v295
    %v308 = vpack.c.b16 %v298, %v297
    %v309 = vpack.c.b16 %v300, %v299
    %v310 = vpack.c.b16 %v302, %v301
    %319 = vmatprep.subr.bf16.mxu0 0
    %320 = vmatpush1.bf16.msra.mxu0 %v303
    %321 = vmatprep.subr.bf16.mxu0 0
    %322 = vmatpush1.bf16.msra.mxu0 %v304
    %323 = vmatprep.subr.bf16.mxu0 0
    %324 = vmatpush1.bf16.msra.mxu0 %v305
    %325 = vmatprep.subr.bf16.mxu0 0
    %326 = vmatpush1.bf16.msra.mxu0 %v306
    %327 = vmatprep.subr.bf16.mxu0 0
    %328 = vmatpush1.bf16.msra.mxu0 %v307
    %329 = vmatprep.subr.bf16.mxu0 0
    %330 = vmatpush1.bf16.msra.mxu0 %v308
    %331 = vmatprep.subr.bf16.mxu0 0
    %332 = vmatpush1.bf16.msra.mxu0 %v309
    %333 = vmatprep.subr.bf16.mxu0 0
    %334 = vmatpush1.bf16.msra.mxu0 %v310
    %335 = vmatprep.subr.bf16.mxu0 0
    %336 = vmatpush1.bf16.msra.mxu0 0
    %337 = vmatprep.subr.bf16.mxu0 0
    %338 = vmatpush1.bf16.msra.mxu0 0
    %339 = vmatprep.subr.bf16.mxu0 0
    %340 = vmatpush1.bf16.msra.mxu0 0
    %341 = vmatprep.subr.bf16.mxu0 0
    %342 = vmatpush1.bf16.msra.mxu0 0
    %343 = vmatprep.subr.bf16.mxu0 0
    %344 = vmatpush1.bf16.msra.mxu0 0
    %345 = vmatprep.subr.bf16.mxu0 0
    %346 = vmatpush1.bf16.msra.mxu0 0
    %347 = vmatprep.subr.bf16.mxu0 0
    %348 = vmatpush1.bf16.msra.mxu0 0
    %349 = vmatprep.subr.bf16.mxu0 0
    %350 = vmatpush1.bf16.msra.mxu0 0
    %351 = vmatprep.mubr.bf16.mxu0 0
    %352 = vmatmul.mubr.bf16.gmra.mrb[0].mxu0 %v249
    %v353 = vpop.f32.mrb[0].mxu0
    %v354 = vadd.f32 %v270, %v353
    %v355 = vpop.f32.mrb[0].mxu0
    %v356 = vpop.f32.mrb[0].mxu0
    %v357 = vpop.f32.mrb[0].mxu0
    %358 = vdwg.mxu0
    %v359 = vxor.u32 %v354, 2147483648
    %v360 = vmul.f32 %v359, 1.442695
    %v361 = vpow.pop %v360
    %v362 = vadd.f32 %v361, 1.0
    %v363 = vrcp.pop %v362
    %v364 = vmul.f32 1.0, %v363
    %v365 = vpack.c.bf16 %v364, %v364
    %v366 = vld [vmem:[%s1 + $0xc0] sm:$0xf]
    %v367 = vld [vmem:[%s1 + $0xc4] sm:$0xf]
    %v368 = vld [vmem:[%s1 + $0xc8] sm:$0xf]
    %v369 = vld [vmem:[%s1 + $0xcc] sm:$0xf]
    %v370 = vld [vmem:[%s1 + $0xd0] sm:$0xf]
    %v371 = vld [vmem:[%s1 + $0xd4] sm:$0xf]
    %v372 = vld [vmem:[%s1 + $0xd8] sm:$0xf]
    %v373 = vld [vmem:[%s1 + $0xdc] sm:$0xf]
    %v374 = vld [vmem:[%s1 + $0xe0] sm:$0xf]
    %v375 = vld [vmem:[%s1 + $0xe4] sm:$0xf]
    %v376 = vld [vmem:[%s1 + $0xe8] sm:$0xf]
    %v377 = vld [vmem:[%s1 + $0xec] sm:$0xf]
    %v378 = vld [vmem:[%s1 + $0xf0] sm:$0xf]
    %v379 = vld [vmem:[%s1 + $0xf4] sm:$0xf]
    %v380 = vld [vmem:[%s1 + $0xf8] sm:$0xf]
    %v381 = vld [vmem:[%s1 + $0xfc] sm:$0xf]
    %v382 = vld [vmem:[%s2 + $0x3] sm:$0x1]
    %v383 = vlaneseq
    %v384 = vshrl.u32 %v383, 7
    %v385 = vsub.s32 0, %v384
    %v386 = vrot.slane %v382, %v385
    %v403 = vunpack.c.l.b16 %v366
    %v404 = vunpack.c.l.b16 %v367
    %v405 = vunpack.c.l.b16 %v368
    %v406 = vunpack.c.l.b16 %v369
    %v407 = vunpack.c.l.b16 %v370
    %v408 = vunpack.c.l.b16 %v371
    %v409 = vunpack.c.l.b16 %v372
    %v410 = vunpack.c.l.b16 %v373
    %v411 = vunpack.c.l.b16 %v374
    %v412 = vunpack.c.l.b16 %v375
    %v413 = vunpack.c.l.b16 %v376
    %v414 = vunpack.c.l.b16 %v377
    %v415 = vunpack.c.l.b16 %v378
    %v416 = vunpack.c.l.b16 %v379
    %v417 = vunpack.c.l.b16 %v380
    %v418 = vunpack.c.l.b16 %v381
    %v419 = vpack.c.b16 %v404, %v403
    %v420 = vpack.c.b16 %v406, %v405
    %v421 = vpack.c.b16 %v408, %v407
    %v422 = vpack.c.b16 %v410, %v409
    %v423 = vpack.c.b16 %v412, %v411
    %v424 = vpack.c.b16 %v414, %v413
    %v425 = vpack.c.b16 %v416, %v415
    %v426 = vpack.c.b16 %v418, %v417
    %435 = vmatprep.subr.bf16.mxu0 0
    %436 = vmatpush1.bf16.msra.mxu0 %v419
    %437 = vmatprep.subr.bf16.mxu0 0
    %438 = vmatpush1.bf16.msra.mxu0 %v420
    %439 = vmatprep.subr.bf16.mxu0 0
    %440 = vmatpush1.bf16.msra.mxu0 %v421
    %441 = vmatprep.subr.bf16.mxu0 0
    %442 = vmatpush1.bf16.msra.mxu0 %v422
    %443 = vmatprep.subr.bf16.mxu0 0
    %444 = vmatpush1.bf16.msra.mxu0 %v423
    %445 = vmatprep.subr.bf16.mxu0 0
    %446 = vmatpush1.bf16.msra.mxu0 %v424
    %447 = vmatprep.subr.bf16.mxu0 0
    %448 = vmatpush1.bf16.msra.mxu0 %v425
    %449 = vmatprep.subr.bf16.mxu0 0
    %450 = vmatpush1.bf16.msra.mxu0 %v426
    %451 = vmatprep.subr.bf16.mxu0 0
    %452 = vmatpush1.bf16.msra.mxu0 0
    %453 = vmatprep.subr.bf16.mxu0 0
    %454 = vmatpush1.bf16.msra.mxu0 0
    %455 = vmatprep.subr.bf16.mxu0 0
    %456 = vmatpush1.bf16.msra.mxu0 0
    %457 = vmatprep.subr.bf16.mxu0 0
    %458 = vmatpush1.bf16.msra.mxu0 0
    %459 = vmatprep.subr.bf16.mxu0 0
    %460 = vmatpush1.bf16.msra.mxu0 0
    %461 = vmatprep.subr.bf16.mxu0 0
    %462 = vmatpush1.bf16.msra.mxu0 0
    %463 = vmatprep.subr.bf16.mxu0 0
    %464 = vmatpush1.bf16.msra.mxu0 0
    %465 = vmatprep.subr.bf16.mxu0 0
    %466 = vmatpush1.bf16.msra.mxu0 0
    %467 = vmatprep.mubr.bf16.mxu0 0
    %468 = vmatmul.mubr.bf16.gmra.mrb[0].mxu0 %v365
    %v469 = vpop.f32.mrb[0].mxu0
    %v470 = vadd.f32 %v386, %v469
    %v471 = vpop.f32.mrb[0].mxu0
    %v472 = vpop.f32.mrb[0].mxu0
    %v473 = vpop.f32.mrb[0].mxu0
    %474 = vdwg.mxu0
    %v475 = vxor.u32 %v470, 2147483648
    %v476 = vmul.f32 %v475, 1.442695
    %v477 = vpow.pop %v476
    %v478 = vadd.f32 %v477, 1.0
    %v479 = vrcp.pop %v478
    %v480 = vmul.f32 1.0, %v479
    %v481 = vpack.c.bf16 %v480, %v480
    %v482 = vld [vmem:[%s1 + $0x100] sm:$0xf]
    %v483 = vld [vmem:[%s1 + $0x104] sm:$0xf]
    %v484 = vld [vmem:[%s1 + $0x108] sm:$0xf]
    %v485 = vld [vmem:[%s1 + $0x10c] sm:$0xf]
    %v486 = vld [vmem:[%s1 + $0x110] sm:$0xf]
    %v487 = vld [vmem:[%s1 + $0x114] sm:$0xf]
    %v488 = vld [vmem:[%s1 + $0x118] sm:$0xf]
    %v489 = vld [vmem:[%s1 + $0x11c] sm:$0xf]
    %v490 = vld [vmem:[%s1 + $0x120] sm:$0xf]
    %v491 = vld [vmem:[%s1 + $0x124] sm:$0xf]
    %v492 = vld [vmem:[%s1 + $0x128] sm:$0xf]
    %v493 = vld [vmem:[%s1 + $0x12c] sm:$0xf]
    %v494 = vld [vmem:[%s1 + $0x130] sm:$0xf]
    %v495 = vld [vmem:[%s1 + $0x134] sm:$0xf]
    %v496 = vld [vmem:[%s1 + $0x138] sm:$0xf]
    %v497 = vld [vmem:[%s1 + $0x13c] sm:$0xf]
    %v514 = vunpack.c.l.b16 %v482
    %v515 = vunpack.c.l.b16 %v483
    %v516 = vunpack.c.l.b16 %v484
    %v517 = vunpack.c.l.b16 %v485
    %v518 = vunpack.c.l.b16 %v486
    %v519 = vunpack.c.l.b16 %v487
    %v520 = vunpack.c.l.b16 %v488
    %v521 = vunpack.c.l.b16 %v489
    %v522 = vunpack.c.l.b16 %v490
    %v523 = vunpack.c.l.b16 %v491
    %v524 = vunpack.c.l.b16 %v492
    %v525 = vunpack.c.l.b16 %v493
    %v526 = vunpack.c.l.b16 %v494
    %v527 = vunpack.c.l.b16 %v495
    %v528 = vunpack.c.l.b16 %v496
    %v529 = vunpack.c.l.b16 %v497
    %v530 = vpack.c.b16 %v515, %v514
    %v531 = vpack.c.b16 %v517, %v516
    %v532 = vpack.c.b16 %v519, %v518
    %v533 = vpack.c.b16 %v521, %v520
    %v534 = vpack.c.b16 %v523, %v522
    %v535 = vpack.c.b16 %v525, %v524
    %v536 = vpack.c.b16 %v527, %v526
    %v537 = vpack.c.b16 %v529, %v528
    %546 = vmatprep.subr.bf16.mxu0 0
    %547 = vmatpush1.bf16.msra.mxu0 %v530
    %548 = vmatprep.subr.bf16.mxu0 0
    %549 = vmatpush1.bf16.msra.mxu0 %v531
    %550 = vmatprep.subr.bf16.mxu0 0
    %551 = vmatpush1.bf16.msra.mxu0 %v532
    %552 = vmatprep.subr.bf16.mxu0 0
    %553 = vmatpush1.bf16.msra.mxu0 %v533
    %554 = vmatprep.subr.bf16.mxu0 0
    %555 = vmatpush1.bf16.msra.mxu0 %v534
    %556 = vmatprep.subr.bf16.mxu0 0
    %557 = vmatpush1.bf16.msra.mxu0 %v535
    %558 = vmatprep.subr.bf16.mxu0 0
    %559 = vmatpush1.bf16.msra.mxu0 %v536
    %560 = vmatprep.subr.bf16.mxu0 0
    %561 = vmatpush1.bf16.msra.mxu0 %v537
    %562 = vmatprep.subr.bf16.mxu0 0
    %563 = vmatpush1.bf16.msra.mxu0 0
    %564 = vmatprep.subr.bf16.mxu0 0
    %565 = vmatpush1.bf16.msra.mxu0 0
    %566 = vmatprep.subr.bf16.mxu0 0
    %567 = vmatpush1.bf16.msra.mxu0 0
    %568 = vmatprep.subr.bf16.mxu0 0
    %569 = vmatpush1.bf16.msra.mxu0 0
    %570 = vmatprep.subr.bf16.mxu0 0
    %571 = vmatpush1.bf16.msra.mxu0 0
    %572 = vmatprep.subr.bf16.mxu0 0
    %573 = vmatpush1.bf16.msra.mxu0 0
    %574 = vmatprep.subr.bf16.mxu0 0
    %575 = vmatpush1.bf16.msra.mxu0 0
    %576 = vmatprep.subr.bf16.mxu0 0
    %577 = vmatpush1.bf16.msra.mxu0 0
    %578 = vmatprep.mubr.bf16.mxu0 0
    %579 = vmatmul.mubr.bf16.gmra.mrb[0].mxu0 %v481
    %v580 = vpop.f32.mrb[0].mxu0
    %v581 = vadd.f32 0.0, %v580
    %v582 = vpop.f32.mrb[0].mxu0
    %v583 = vpop.f32.mrb[0].mxu0
    %v584 = vpop.f32.mrb[0].mxu0
    %585 = vdwg.mxu0
    %586 = vst [vmem:[#allocation2] sm:$0xff] %v581
    // Predicated region
    $region14: #{neural_network_forward.1} parent=1 // pred_check
      _
    $region15: #{neural_network_forward.1} parent=1 // pred_check_branch
      %588 = sbr.rel (0) target = $region17
    $region16: #{neural_network_forward.1} parent=1 // pred_region
      %s590 = ssub.s32 128, 128
      %591 = vsyncadd [#allocation3], %s590
      %s593 = sshll.u32 [#allocation2], 4
      %s594 = int_to_ptr.vmem [resolvable:$true] %s593
      %596 = dma.vmem_to_hbm [thread:$0]  %s594, 128, %s3, [#allocation3]
    $region17: #{neural_network_forward.1} parent=1 // pred_fallthru
      _
    // Predicated region
    $region18: #{neural_network_forward.1} parent=1 // pred_check
      _
    $region19: #{neural_network_forward.1} parent=1 // pred_check_branch
      %598 = sbr.rel (0) target = $region21
    $region20: #{neural_network_forward.1} parent=1 // pred_region
      %599 = dma.done [#allocation3], 128
    $region21: #{neural_network_forward.1} parent=1 // pred_fallthru
      _
    %600 = vsyncpa [#allocation3], 1

</llo_original>
